<compile_context>
chip_gen: v5e
topology: v5e:2x2
jax: 0.10.0
libtpu: 0.0.40
codegen_flags: <defaults>
</compile_context>

<pallas_src>
import functools

import jax
import jax.numpy as jnp
from jax import lax
from jax.experimental import pallas as pl
from jax.experimental.pallas import tpu as pltpu


_NEG_INF = -1e30  # finite "-inf" so masked columns never produce NaNs


def _round_up(x, m):
    return ((x + m - 1) // m) * m


def _pick_vmem_limit_bytes():
    """Generation-aware scoped-VMEM limit.

    v5e/v6e have 128 MiB physical VMEM -> 64 MiB limit is safe headroom.
    v7x has only 64 MiB physical -> cap at ~56 MiB (7/8 of capacity).
    Falls back to a conservative 48 MiB if the query is unavailable.
    """
    cap = None
    try:
        cap = getattr(pltpu.get_tpu_info(), "vmem_capacity_bytes", None)
    except Exception:
        cap = None
    if not cap:
        return 48 * 1024 * 1024
    cap = int(cap)
    if cap >= 128 * 1024 * 1024:
        return 64 * 1024 * 1024
    return min(56 * 1024 * 1024, (cap * 7) // 8)


def _num_tensorcores():
    """Best-effort TensorCore count (used only as a tiling heuristic)."""
    try:
        info = pltpu.get_tpu_info()
        for attr in ("num_tensorcores", "tensorcore_count", "num_cores", "core_count"):
            v = getattr(info, attr, None)
            if isinstance(v, int) and 0 < v <= 8:
                return v
    except Exception:
        pass
    try:
        if "v7" in jax.devices()[0].device_kind.lower():
            return 2
    except Exception:
        pass
    return 1


def _logits_lse_kernel(x_ref, wt_ref, logits_ref, lse_ref, m_sc, l_sc, *,
                       n_valid_last, needs_mask):
    """One grid step: raw logits for (row tile i, vocab tile j) + online LSE stats.

    x_ref     : (tile_m, H_pad)   bf16, resident across j
    wt_ref    : (H_pad, tile_v)   bf16, streamed across j
    logits_ref: (tile_m, tile_v)  f32 raw logits (tiled output)
    lse_ref   : (tile_m, 1)       f32 per-row log-sum-exp (written at last j)
    m_sc, l_sc: (tile_m, 1)       f32 running max / running sum-exp
    """
    j = pl.program_id(1)
    nj = pl.num_programs(1)

    @pl.when(j == 0)
    def _init():
        m_sc[...] = jnp.full_like(m_sc, _NEG_INF)
        l_sc[...] = jnp.zeros_like(l_sc)

    # MXU matmul, f32 accumulation.
    logits = jnp.dot(x_ref[...], wt_ref[...], preferred_element_type=jnp.float32)

    def update_stats(vals):
        m_prev = m_sc[...]
        m_new = jnp.maximum(m_prev, jnp.max(vals, axis=-1, keepdims=True))
        l_sc[...] = l_sc[...] * jnp.exp(m_prev - m_new) + jnp.sum(
            jnp.exp(vals - m_new), axis=-1, keepdims=True)
        m_sc[...] = m_new

    if needs_mask:
        # Only the LAST vocab tile contains padded columns -> pay the
        # iota/compare/select cost on that single tile per row tile.
        @pl.when(j < nj - 1)
        def _plain():
            update_stats(logits)

        @pl.when(j == nj - 1)
        def _masked():
            col = lax.broadcasted_iota(jnp.int32, logits.shape, 1)
            update_stats(jnp.where(col < n_valid_last, logits, _NEG_INF))
    else:
        update_stats(logits)

    # Lane-dense tiled store of the raw logits (padded columns are sliced off
    # downstream, so they are stored unmasked).
    logits_ref[...] = logits

    @pl.when(j == nj - 1)
    def _finalize():
        lse_ref[...] = m_sc[...] + jnp.log(l_sc[...])


def _normalize_kernel(logits_ref, lse_ref, o_ref):
    """log_probs = logits - lse (broadcast over the vocab tile)."""
    o_ref[...] = (logits_ref[...] - lse_ref[...]).astype(o_ref.dtype)


def prepare_generator_weight(weight, *, compute_dtype=jnp.bfloat16,
                             hidden_align=128, vocab_align=128):
    """One-time weight preparation (call at module init, NOT per forward).

    weight: (n_words, hidden_size) -- PyTorch nn.Linear weight layout.
    Returns W^T zero-padded to (H_pad, V_pad) in `compute_dtype` so forward
    calls never pay for the transpose / pad / cast HBM traffic.
    (Set hidden_align=256 to match the 256-wide MXU on v6e/v7x if measurements
    show a win.)
    """
    weight = jnp.asarray(weight)
    n_words, hidden = weight.shape
    h_pad = _round_up(hidden, hidden_align)
    v_pad = _round_up(n_words, vocab_align)
    if h_pad == hidden and v_pad == n_words:
        return weight.T.astype(compute_dtype)
    wt = jnp.zeros((h_pad, v_pad), dtype=compute_dtype)
    return wt.at[:hidden, :n_words].set(weight.T.astype(compute_dtype))


def generator_forward(x, wt_prepared, n_words, *, tile_m=512, tile_v=1024,
                      compute_dtype=jnp.bfloat16, out_dtype=jnp.float32):
    """
    x:           (..., hidden_size) float32
    wt_prepared: (H_pad, V_pad)     from prepare_generator_weight()
    returns      (..., n_words)     log-probabilities (out_dtype)
    """
    hidden = x.shape[-1]
    lead = x.shape[:-1]
    h_pad, v_pad = wt_prepared.shape
    assert wt_prepared.dtype == compute_dtype
    assert h_pad >= hidden and h_pad % 128 == 0
    assert v_pad >= n_words and v_pad % 128 == 0

    x2 = x.reshape(-1, hidden)
    m = x2.shape[0]

    # --- tile_v: largest multiple of 128 that divides V_pad, capped by request.
    tile_v = max(128, (min(int(tile_v), v_pad) // 128) * 128)
    while v_pad % tile_v != 0:
        tile_v -= 128

    # --- tile_m: big for arithmetic intensity on the weight stream, but do not
    # over-pad tiny batches; on multi-TC chips (v7x) keep >= num_tc row blocks.
    num_tc = _num_tensorcores()
    tile_m = max(128, (min(int(tile_m), _round_up(m, 128)) // 128) * 128)
    m_pad = _round_up(m, tile_m)
    while num_tc >= 2 and tile_m > 128 and (m_pad // tile_m) < num_tc:
        tile_m //= 2
        m_pad = _round_up(m, tile_m)

    n_mtiles = m_pad // tile_m
    n_vtiles = v_pad // tile_v
    n_valid_last = n_words - (n_vtiles - 1) * tile_v
    needs_mask = (v_pad != n_words)

    # Zero padding of rows / hidden is exact for the matmul; skip the pad copy
    # entirely when the shapes are already aligned.
    if m_pad == m and h_pad == hidden:
        x_p = x2.astype(compute_dtype)
    else:
        x_p = jnp.zeros((m_pad, h_pad), dtype=compute_dtype)
        x_p = x_p.at[:m, :hidden].set(x2.astype(compute_dtype))

    vmem_limit = _pick_vmem_limit_bytes()

    # Weight vocab-tile spec; triple-buffer in the compute-bound (large tile_m)
    # regime to hide HBM latency jitter.
    w_spec = pl.BlockSpec((h_pad, tile_v), lambda i, j: (0, j))
    if tile_m >= 512 and n_vtiles >= 3:
        try:
            w_spec = pl.BlockSpec((h_pad, tile_v), lambda i, j: (0, j),
                                  pipeline_mode=pl.Buffered(3))
        except TypeError:
            pass  # older BlockSpec signature: fall back to default double-buffering

    kernel1 = functools.partial(_logits_lse_kernel,
                                n_valid_last=n_valid_last,
                                needs_mask=needs_mask)

    # ---- Pass 1: raw logits (tiled) + per-row LSE --------------------------
    logits_p, lse_p = pl.pallas_call(
        kernel1,
        out_shape=(
            jax.ShapeDtypeStruct((m_pad, v_pad), jnp.float32),  # raw logits
            jax.ShapeDtypeStruct((m_pad, 1), jnp.float32),      # per-row LSE
        ),
        grid_spec=pltpu.PrefetchScalarGridSpec(
            num_scalar_prefetch=0,
            grid=(n_mtiles, n_vtiles),
            in_specs=[
                # x row tile: constant across j -> stays resident in VMEM
                pl.BlockSpec((tile_m, h_pad), lambda i, j: (i, 0)),
                # weight vocab tile: pipelined across j
                w_spec,
            ],
            out_specs=[
                # Tiled logits output: VMEM use independent of vocab size.
                pl.BlockSpec((tile_m, tile_v), lambda i, j: (i, j)),
                # Tiny LSE output, resident across j, written at the last tile.
                pl.BlockSpec((tile_m, 1), lambda i, j: (i, 0)),
            ],
            scratch_shapes=[
                pltpu.VMEM((tile_m, 1), jnp.float32),  # running max
                pltpu.VMEM((tile_m, 1), jnp.float32),  # running sum-exp
            ],
        ),
        compiler_params=pltpu.CompilerParams(
            dimension_semantics=("parallel", "arbitrary"),
            vmem_limit_bytes=vmem_limit,
        ),
    )(x_p, wt_prepared)

    # ---- Pass 2: cheap elementwise normalization, written directly to the
    # unpadded (M, n_words) output (edge blocks masked by Pallas). ----------
    out = pl.pallas_call(
        _normalize_kernel,
        out_shape=jax.ShapeDtypeStruct((m, n_words), out_dtype),
        grid_spec=pltpu.PrefetchScalarGridSpec(
            num_scalar_prefetch=0,
            grid=(n_mtiles, n_vtiles),
            in_specs=[
                pl.BlockSpec((tile_m, tile_v), lambda i, j: (i, j)),
                pl.BlockSpec((tile_m, 1), lambda i, j: (i, 0)),
            ],
            out_specs=pl.BlockSpec((tile_m, tile_v), lambda i, j: (i, j)),
        ),
        compiler_params=pltpu.CompilerParams(
            dimension_semantics=("parallel", "parallel"),
            vmem_limit_bytes=vmem_limit,
        ),
    )(logits_p, lse_p)

    return out.reshape(*lead, n_words)


if __name__ == "__main__":
    # Case 1: small shapes consistent with the module:
    # (batch, seq, hidden) -> (batch, seq, n_words)
    batch, seq, hidden_size, n_words = 2, 8, 32, 512

    key = jax.random.PRNGKey(0)
    kx, kw = jax.random.split(key)

    x = jax.random.normal(kx, (batch, seq, hidden_size), dtype=jnp.float32)
    # "embedding-like" init for proj.weight (n_words, hidden_size)
    weight = jax.random.normal(kw, (n_words, hidden_size), dtype=jnp.float32) * 0.01

    # One-time weight prep (transpose + pad + bf16 cast), hoisted out of forward.
    wt_prep = prepare_generator_weight(weight)

    out = generator_forward(x, wt_prep, n_words)
    out = jax.block_until_ready(out)
    assert out.shape == (batch, seq, n_words)
    assert jnp.all(jnp.isfinite(out))

    # Reference with the same bf16 matmul inputs / f32 accumulation.
    x_b = x.astype(jnp.bfloat16).astype(jnp.float32)
    w_b = weight.T.astype(jnp.bfloat16).astype(jnp.float32)
    ref_bf16 = jax.nn.log_softmax(x_b @ w_b, axis=-1)
    assert jnp.allclose(out, ref_bf16, atol=1e-4, rtol=1e-4)

    # Loose sanity check against exact f32 module semantics (bf16 MXU inputs).
    ref_f32 = jax.nn.log_softmax(x @ weight.T, axis=-1)
    assert jnp.allclose(out, ref_f32, atol=5e-3, rtol=5e-3)

    # Case 2: unaligned hidden / vocab + multiple vocab tiles, exercising the
    # padded-row, padded-hidden and last-tile-mask paths.
    n_words2, hidden2 = 500, 48
    kx2, kw2 = jax.random.split(jax.random.PRNGKey(1))
    x2 = jax.random.normal(kx2, (3, 5, hidden2), dtype=jnp.float32)
    w2 = jax.random.normal(kw2, (n_words2, hidden2), dtype=jnp.float32) * 0.02
    wt2 = prepare_generator_weight(w2)
    out2 = jax.block_until_ready(generator_forward(x2, wt2, n_words2, tile_v=256))
    assert out2.shape == (3, 5, n_words2)
    assert jnp.all(jnp.isfinite(out2))
    ref2 = jax.nn.log_softmax(
        x2.astype(jnp.bfloat16).astype(jnp.float32)
        @ w2.T.astype(jnp.bfloat16).astype(jnp.float32), axis=-1)
    assert jnp.allclose(out2, ref2, atol=1e-4, rtol=1e-4)

    print("KERNEL_OK")
</pallas_src>

<mosaic_0001>
module attributes {stable_mosaic.version = 11 : i64} {
  func.func @_logits_lse_kernel(%arg0: i32, %arg1: i32, %arg2: memref<128x128xbf16, #tpu.memory_space<vmem>>, %arg3: memref<128x512xbf16, #tpu.memory_space<vmem>>, %arg4: memref<128x512xf32, #tpu.memory_space<vmem>>, %arg5: memref<128x1xf32, #tpu.memory_space<vmem>>, %arg6: memref<128x1xf32, #tpu.memory_space<vmem>>, %arg7: memref<128x1xf32, #tpu.memory_space<vmem>>) attributes {dimension_semantics = [#tpu.dimension_semantics<parallel>, #tpu.dimension_semantics<arbitrary>], iteration_bounds = array<i64: 1, 1>, scalar_prefetch = 0 : i64, scratch_operands = 2 : i64, tpu.core_type = #tpu.core_type<tc>, window_params = [{transform_indices = @transform_0, window_bounds = array<i64: 128, 128>}, {transform_indices = @transform_1, window_bounds = array<i64: 128, 512>}, {transform_indices = @transform_2, window_bounds = array<i64: 128, 512>}, {transform_indices = @transform_3, window_bounds = array<i64: 128, 1>}]} {
    %c0_i32 = arith.constant 0 : i32
    %0 = arith.cmpi eq, %arg1, %c0_i32 : i32
    %1 = arith.extui %0 : i1 to i32
    %c0_i32_0 = arith.constant 0 : i32
    %2 = arith.cmpi ne, %1, %c0_i32_0 : i32
    scf.if %2 {
      %cst_18 = arith.constant -1.000000e+30 : f32
      %26 = vector.broadcast %cst_18 : f32 to vector<128x1xf32>
      %c0_19 = arith.constant 0 : index
      %c0_20 = arith.constant 0 : index
      %27 = vector.load %arg6[%c0_19, %c0_20] : memref<128x1xf32, #tpu.memory_space<vmem>>, vector<128x1xf32>
      tpu.vector_store %arg6[%c0_19, %c0_20], %26 {strides = array<i32>} : memref<128x1xf32, #tpu.memory_space<vmem>>, vector<128x1xf32>,
      %cst_21 = arith.constant 0.000000e+00 : f32
      %28 = vector.broadcast %cst_21 : f32 to vector<128x1xf32>
      %c0_22 = arith.constant 0 : index
      %c0_23 = arith.constant 0 : index
      %29 = vector.load %arg7[%c0_22, %c0_23] : memref<128x1xf32, #tpu.memory_space<vmem>>, vector<128x1xf32>
      tpu.vector_store %arg7[%c0_22, %c0_23], %28 {strides = array<i32>} : memref<128x1xf32, #tpu.memory_space<vmem>>, vector<128x1xf32>,
    } else {
    }
    %c0 = arith.constant 0 : index
    %c0_1 = arith.constant 0 : index
    %3 = vector.load %arg2[%c0, %c0_1] : memref<128x128xbf16, #tpu.memory_space<vmem>>, vector<128x128xbf16>
    %c0_2 = arith.constant 0 : index
    %c0_3 = arith.constant 0 : index
    %4 = vector.load %arg3[%c0_2, %c0_3] : memref<128x512xbf16, #tpu.memory_space<vmem>>, vector<128x512xbf16>
    %cst = arith.constant dense<0.000000e+00> : vector<128x512xf32>
    %5 = tpu.matmul %3, %4, %cst {dimension_numbers = #tpu.dot_dimension_numbers<[1], [0], [0], [1], [0, 0, 1, 1], [], []>} : vector<128x128xbf16>, vector<128x512xbf16>, vector<128x512xf32> -> vector<128x512xf32>
    %c0_4 = arith.constant 0 : index
    %c0_5 = arith.constant 0 : index
    %6 = vector.load %arg6[%c0_4, %c0_5] : memref<128x1xf32, #tpu.memory_space<vmem>>, vector<128x1xf32>
    %cst_6 = arith.constant dense<0xFF800000> : vector<128xf32>
    %7 = vector.multi_reduction <maximumf>, %5, %cst_6 [1] : vector<128x512xf32> to vector<128xf32>
    %8 = vector.shape_cast %7 : vector<128xf32> to vector<128x1xf32>
    %9 = arith.maximumf %6, %8 : vector<128x1xf32>
    %c0_7 = arith.constant 0 : index
    %c0_8 = arith.constant 0 : index
    %10 = vector.load %arg7[%c0_7, %c0_8] : memref<128x1xf32, #tpu.memory_space<vmem>>, vector<128x1xf32>
    %11 = arith.subf %6, %9 : vector<128x1xf32>
    %12 = math.exp %11 : vector<128x1xf32>
    %13 = arith.mulf %10, %12 : vector<128x1xf32>
    %14 = vector.broadcast %9 : vector<128x1xf32> to vector<128x512xf32>
    %15 = arith.subf %5, %14 : vector<128x512xf32>
    %16 = math.exp %15 : vector<128x512xf32>
    %cst_9 = arith.constant dense<0.000000e+00> : vector<128xf32>
    %17 = vector.multi_reduction <add>, %16, %cst_9 [1] : vector<128x512xf32> to vector<128xf32>
    %18 = vector.shape_cast %17 : vector<128xf32> to vector<128x1xf32>
    %19 = arith.addf %13, %18 : vector<128x1xf32>
    %c0_10 = arith.constant 0 : index
    %c0_11 = arith.constant 0 : index
    %20 = vector.load %arg7[%c0_10, %c0_11] : memref<128x1xf32, #tpu.memory_space<vmem>>, vector<128x1xf32>
    tpu.vector_store %arg7[%c0_10, %c0_11], %19 {strides = array<i32>} : memref<128x1xf32, #tpu.memory_space<vmem>>, vector<128x1xf32>,
    %c0_12 = arith.constant 0 : index
    %c0_13 = arith.constant 0 : index
    %21 = vector.load %arg6[%c0_12, %c0_13] : memref<128x1xf32, #tpu.memory_space<vmem>>, vector<128x1xf32>
    tpu.vector_store %arg6[%c0_12, %c0_13], %9 {strides = array<i32>} : memref<128x1xf32, #tpu.memory_space<vmem>>, vector<128x1xf32>,
    %c0_14 = arith.constant 0 : index
    %c0_15 = arith.constant 0 : index
    %22 = vector.load %arg4[%c0_14, %c0_15] : memref<128x512xf32, #tpu.memory_space<vmem>>, vector<128x512xf32>
    tpu.vector_store %arg4[%c0_14, %c0_15], %5 {strides = array<i32>} : memref<128x512xf32, #tpu.memory_space<vmem>>, vector<128x512xf32>,
    %c0_i32_16 = arith.constant 0 : i32
    %23 = arith.cmpi eq, %arg1, %c0_i32_16 : i32
    %24 = arith.extui %23 : i1 to i32
    %c0_i32_17 = arith.constant 0 : i32
    %25 = arith.cmpi ne, %24, %c0_i32_17 : i32
    scf.if %25 {
      %c0_18 = arith.constant 0 : index
      %c0_19 = arith.constant 0 : index
      %26 = vector.load %arg6[%c0_18, %c0_19] : memref<128x1xf32, #tpu.memory_space<vmem>>, vector<128x1xf32>
      %c0_20 = arith.constant 0 : index
      %c0_21 = arith.constant 0 : index
      %27 = vector.load %arg7[%c0_20, %c0_21] : memref<128x1xf32, #tpu.memory_space<vmem>>, vector<128x1xf32>
      %28 = math.log %27 : vector<128x1xf32>
      %29 = arith.addf %26, %28 : vector<128x1xf32>
      %c0_22 = arith.constant 0 : index
      %c0_23 = arith.constant 0 : index
      %30 = vector.load %arg5[%c0_22, %c0_23] : memref<128x1xf32, #tpu.memory_space<vmem>>, vector<128x1xf32>
      tpu.vector_store %arg5[%c0_22, %c0_23], %29 {strides = array<i32>} : memref<128x1xf32, #tpu.memory_space<vmem>>, vector<128x1xf32>,
    } else {
    }
    return
  }
  func.func @transform_0(%arg0: i32, %arg1: i32) -> (i32, i32) {
    %c0_i32 = arith.constant 0 : i32
    %c0_i32_0 = arith.constant 0 : i32
    return %arg0, %c0_i32 : i32, i32
  }
  func.func @transform_1(%arg0: i32, %arg1: i32) -> (i32, i32) {
    %c0_i32 = arith.constant 0 : i32
    %c0_i32_0 = arith.constant 0 : i32
    return %c0_i32, %arg1 : i32, i32
  }
  func.func @transform_2(%arg0: i32, %arg1: i32) -> (i32, i32) {
    %c0_i32 = arith.constant 0 : i32
    return %arg0, %arg1 : i32, i32
  }
  func.func @transform_3(%arg0: i32, %arg1: i32) -> (i32, i32) {
    %c0_i32 = arith.constant 0 : i32
    %c0_i32_0 = arith.constant 0 : i32
    return %arg0, %c0_i32 : i32, i32
  }
}

</mosaic_0001>

<llo_original>
// kernel: tpu_custom_call.1
$region0: #{tpu_custom_call.1}
  #allocation0 [shape = 'u32[]', space=smem, size = 0x4, offset = 0x4, fixed_abs, tag = 'smem constant byte address 0x4 - core index']
  #allocation1 [shape = 'u32[72,128]{1,0:T(1,128)}', space=vmem, size = 0x9000, scoped, tag = 'internal scratch']
  #allocation2 [shape = 'f32[128,1]{1,0:T(8,128)}', space=vmem, size = 0x10000, scoped, tag = 'scratch operand']
  #allocation3 [shape = 'f32[128,1]{1,0:T(8,128)}', space=vmem, size = 0x10000, scoped, tag = 'scratch operand']
  %s0 = inlined_call_operand.hbm [shape: bf16[128,128], index: 0, kind: input, shape index: {}]
  %s1 = inlined_call_operand.hbm [shape: bf16[128,512], index: 1, kind: input, shape index: {}]
  %s2 = inlined_call_operand.hbm [shape: f32[128,512], index: 2, kind: output, shape index: {0}]
  %s3 = inlined_call_operand.vmem [shape: f32[128,1], index: 3, kind: output, shape index: {1}]
  %4 = xla_tuple %s2, %s3
  %s5 = sld [smem:[#allocation0]]
  $region42: #{tpu_custom_call.1} parent=0
    _
  %s7 = ssub.s32 1, %s5
  %s8 = scalar_select 0, %s7, %s5
  $region1: #{tpu_custom_call.1} parent=0
    #allocation4 [shape = 'u8[32768]{0}', space=vmem, size = 0x8000, scoped, tag = 'input window, operand 0, single buffered']
    #allocation5 [shape = 's32[1]{0}', space=sflag, size = 0x4, scoped, tag = 'scoped memory for tpu_custom_call.1']
    #allocation6 [shape = 's32[1]{0}', space=sflag, size = 0x4, scoped, tag = 'scoped memory for tpu_custom_call.1']
    #allocation7 [shape = 'u8[131072]{0}', space=vmem, size = 0x20000, scoped, tag = 'input window, operand 1, single buffered']
    #allocation8 [shape = 's32[1]{0}', space=sflag, size = 0x4, scoped, tag = 'scoped memory for tpu_custom_call.1']
    #allocation9 [shape = 'u8[262144]{0}', space=vmem, size = 0x40000, scoped, tag = 'output window, operand 0, single buffered']
    %9 = vsyncpa [#allocation5], 0
    %10 = vsyncpa [#allocation8], 0
    %11 = vsyncpa [#allocation6], 0
    // Predicated region
    $region2: #{tpu_custom_call.1} parent=1 // pred_check
      _
    $region3: #{tpu_custom_call.1} parent=1 // pred_check_branch
      %13 = sbr.rel (0) target = $region5
    $region4: #{tpu_custom_call.1} parent=1 // pred_region
      %15 = vsyncadd [#allocation5], 0
      %s16 = sshll.u32 %s0, 4
      %s17 = int_to_ptr.hbm [resolvable:$true] %s16
      %s18 = sshll.u32 [#allocation4], 4
      %s19 = int_to_ptr.vmem [resolvable:$true] %s18
      %24 = dma.hbm_to_vmem [thread:$0]  %s17, 1024, %s19, [#allocation5], 64, 64, 4
    $region5: #{tpu_custom_call.1} parent=1 // pred_fallthru
      _
    // Predicated region
    $region6: #{tpu_custom_call.1} parent=1 // pred_check
      _
    $region7: #{tpu_custom_call.1} parent=1 // pred_check_branch
      %26 = sbr.rel (0) target = $region9
    $region8: #{tpu_custom_call.1} parent=1 // pred_region
      %28 = vsyncadd [#allocation8], 0
      %s29 = sshll.u32 %s1, 4
      %s30 = int_to_ptr.hbm [resolvable:$true] %s29
      %s31 = sshll.u32 [#allocation7], 4
      %s32 = int_to_ptr.vmem [resolvable:$true] %s31
      %37 = dma.hbm_to_vmem [thread:$0]  %s30, 4096, %s32, [#allocation8], 256, 256, 16
    $region9: #{tpu_custom_call.1} parent=1 // pred_fallthru
      _
    // Predicated region
    $region10: #{tpu_custom_call.1} parent=1 // pred_check
      _
    $region11: #{tpu_custom_call.1} parent=1 // pred_check_branch
      %39 = sbr.rel (0) target = $region13
    $region12: #{tpu_custom_call.1} parent=1 // pred_region
      %41 = dma.done [#allocation5], 1024
    $region13: #{tpu_custom_call.1} parent=1 // pred_fallthru
      _
    // Predicated region
    $region14: #{tpu_custom_call.1} parent=1 // pred_check
      _
    $region15: #{tpu_custom_call.1} parent=1 // pred_check_branch
      %43 = sbr.rel (0) target = $region17
    $region16: #{tpu_custom_call.1} parent=1 // pred_region
      %45 = dma.done [#allocation8], 4096
    $region17: #{tpu_custom_call.1} parent=1 // pred_fallthru
      _
    %p46 = scmp.eq.s32.totalorder 0, 0
    // Predicated region
    $region18: #{tpu_custom_call.1} parent=1 // pred_check
      %p47 = pneg %p46
    $region19: #{tpu_custom_call.1} parent=1 // pred_check_branch
      %49 = sbr.rel (%p47) target = $region21
    $region20: #{tpu_custom_call.1} parent=1 // pred_region
      %vm50 = vcmask 7168
      %51 = vst.msk [vmem:[#allocation2] sm:$0xff] %vm50, -1e+30
      %52 = vst.msk [vmem:[#allocation2 + $0x8] sm:$0xff] %vm50, -1e+30
      %53 = vst.msk [vmem:[#allocation2 + $0x10] sm:$0xff] %vm50, -1e+30
      %54 = vst.msk [vmem:[#allocation2 + $0x18] sm:$0xff] %vm50, -1e+30
      %55 = vst.msk [vmem:[#allocation2 + $0x20] sm:$0xff] %vm50, -1e+30
      %56 = vst.msk [vmem:[#allocation2 + $0x28] sm:$0xff] %vm50, -1e+30
      %57 = vst.msk [vmem:[#allocation2 + $0x30] sm:$0xff] %vm50, -1e+30
      %58 = vst.msk [vmem:[#allocation2 + $0x38] sm:$0xff] %vm50, -1e+30
      %59 = vst.msk [vmem:[#allocation2 + $0x40] sm:$0xff] %vm50, -1e+30
      %60 = vst.msk [vmem:[#allocation2 + $0x48] sm:$0xff] %vm50, -1e+30
      %61 = vst.msk [vmem:[#allocation2 + $0x50] sm:$0xff] %vm50, -1e+30
      %62 = vst.msk [vmem:[#allocation2 + $0x58] sm:$0xff] %vm50, -1e+30
      %63 = vst.msk [vmem:[#allocation2 + $0x60] sm:$0xff] %vm50, -1e+30
      %64 = vst.msk [vmem:[#allocation2 + $0x68] sm:$0xff] %vm50, -1e+30
      %65 = vst.msk [vmem:[#allocation2 + $0x70] sm:$0xff] %vm50, -1e+30
      %66 = vst.msk [vmem:[#allocation2 + $0x78] sm:$0xff] %vm50, -1e+30
      %67 = vst.msk [vmem:[#allocation3] sm:$0xff] %vm50, 0.0
      %68 = vst.msk [vmem:[#allocation3 + $0x8] sm:$0xff] %vm50, 0.0
      %69 = vst.msk [vmem:[#allocation3 + $0x10] sm:$0xff] %vm50, 0.0
      %70 = vst.msk [vmem:[#allocation3 + $0x18] sm:$0xff] %vm50, 0.0
      %71 = vst.msk [vmem:[#allocation3 + $0x20] sm:$0xff] %vm50, 0.0
      %72 = vst.msk [vmem:[#allocation3 + $0x28] sm:$0xff] %vm50, 0.0
      %73 = vst.msk [vmem:[#allocation3 + $0x30] sm:$0xff] %vm50, 0.0
      %74 = vst.msk [vmem:[#allocation3 + $0x38] sm:$0xff] %vm50, 0.0
      %75 = vst.msk [vmem:[#allocation3 + $0x40] sm:$0xff] %vm50, 0.0
      %76 = vst.msk [vmem:[#allocation3 + $0x48] sm:$0xff] %vm50, 0.0
      %77 = vst.msk [vmem:[#allocation3 + $0x50] sm:$0xff] %vm50, 0.0
      %78 = vst.msk [vmem:[#allocation3 + $0x58] sm:$0xff] %vm50, 0.0
      %79 = vst.msk [vmem:[#allocation3 + $0x60] sm:$0xff] %vm50, 0.0
      %80 = vst.msk [vmem:[#allocation3 + $0x68] sm:$0xff] %vm50, 0.0
      %81 = vst.msk [vmem:[#allocation3 + $0x70] sm:$0xff] %vm50, 0.0
      %82 = vst.msk [vmem:[#allocation3 + $0x78] sm:$0xff] %vm50, 0.0
    $region21: #{tpu_custom_call.1} parent=1 // pred_fallthru
      _
    %v83 = vld [vmem:[#allocation4] sm:$0xf]
    %v84 = vld [vmem:[#allocation4 + $0x4] sm:$0xf]
    %v85 = vld [vmem:[#allocation4 + $0x8] sm:$0xf]
    %v86 = vld [vmem:[#allocation4 + $0xc] sm:$0xf]
    %v87 = vld [vmem:[#allocation4 + $0x10] sm:$0xf]
    %v88 = vld [vmem:[#allocation4 + $0x14] sm:$0xf]
    %v89 = vld [vmem:[#allocation4 + $0x18] sm:$0xf]
    %v90 = vld [vmem:[#allocation4 + $0x1c] sm:$0xf]
    %v91 = vld [vmem:[#allocation4 + $0x20] sm:$0xf]
    %v92 = vld [vmem:[#allocation4 + $0x24] sm:$0xf]
    %v93 = vld [vmem:[#allocation4 + $0x28] sm:$0xf]
    %v94 = vld [vmem:[#allocation4 + $0x2c] sm:$0xf]
    %v95 = vld [vmem:[#allocation4 + $0x30] sm:$0xf]
    %v96 = vld [vmem:[#allocation4 + $0x34] sm:$0xf]
    %v97 = vld [vmem:[#allocation4 + $0x38] sm:$0xf]
    %v98 = vld [vmem:[#allocation4 + $0x3c] sm:$0xf]
    %v99 = vld [vmem:[#allocation7] sm:$0xff]
    %v100 = vld [vmem:[#allocation7 + $0x8] sm:$0xff]
    %v101 = vld [vmem:[#allocation7 + $0x10] sm:$0xff]
    %v102 = vld [vmem:[#allocation7 + $0x18] sm:$0xff]
    %v103 = vld [vmem:[#allocation7 + $0x20] sm:$0xff]
    %v104 = vld [vmem:[#allocation7 + $0x28] sm:$0xff]
    %v105 = vld [vmem:[#allocation7 + $0x30] sm:$0xff]
    %v106 = vld [vmem:[#allocation7 + $0x38] sm:$0xff]
    %v107 = vld [vmem:[#allocation7 + $0x40] sm:$0xff]
    %v108 = vld [vmem:[#allocation7 + $0x48] sm:$0xff]
    %v109 = vld [vmem:[#allocation7 + $0x50] sm:$0xff]
    %v110 = vld [vmem:[#allocation7 + $0x58] sm:$0xff]
    %v111 = vld [vmem:[#allocation7 + $0x60] sm:$0xff]
    %v112 = vld [vmem:[#allocation7 + $0x68] sm:$0xff]
    %v113 = vld [vmem:[#allocation7 + $0x70] sm:$0xff]
    %v114 = vld [vmem:[#allocation7 + $0x78] sm:$0xff]
    %v115 = vld [vmem:[#allocation7 + $0x80] sm:$0xff]
    %v116 = vld [vmem:[#allocation7 + $0x88] sm:$0xff]
    %v117 = vld [vmem:[#allocation7 + $0x90] sm:$0xff]
    %v118 = vld [vmem:[#allocation7 + $0x98] sm:$0xff]
    %v119 = vld [vmem:[#allocation7 + $0xa0] sm:$0xff]
    %v120 = vld [vmem:[#allocation7 + $0xa8] sm:$0xff]
    %v121 = vld [vmem:[#allocation7 + $0xb0] sm:$0xff]
    %v122 = vld [vmem:[#allocation7 + $0xb8] sm:$0xff]
    %v123 = vld [vmem:[#allocation7 + $0xc0] sm:$0xff]
    %v124 = vld [vmem:[#allocation7 + $0xc8] sm:$0xff]
    %v125 = vld [vmem:[#allocation7 + $0xd0] sm:$0xff]
    %v126 = vld [vmem:[#allocation7 + $0xd8] sm:$0xff]
    %v127 = vld [vmem:[#allocation7 + $0xe0] sm:$0xff]
    %v128 = vld [vmem:[#allocation7 + $0xe8] sm:$0xff]
    %v129 = vld [vmem:[#allocation7 + $0xf0] sm:$0xff]
    %v130 = vld [vmem:[#allocation7 + $0xf8] sm:$0xff]
    %v147 = vunpack.c.l.b16 %v83
    %v148 = vunpack.c.l.b16 %v84
    %v149 = vunpack.c.l.b16 %v85
    %v150 = vunpack.c.l.b16 %v86
    %v151 = vunpack.c.l.b16 %v87
    %v152 = vunpack.c.l.b16 %v88
    %v153 = vunpack.c.l.b16 %v89
    %v154 = vunpack.c.l.b16 %v90
    %v155 = vunpack.c.l.b16 %v91
    %v156 = vunpack.c.l.b16 %v92
    %v157 = vunpack.c.l.b16 %v93
    %v158 = vunpack.c.l.b16 %v94
    %v159 = vunpack.c.l.b16 %v95
    %v160 = vunpack.c.l.b16 %v96
    %v161 = vunpack.c.l.b16 %v97
    %v162 = vunpack.c.l.b16 %v98
    %v163 = vpack.c.b16 %v148, %v147
    %v164 = vpack.c.b16 %v150, %v149
    %v165 = vpack.c.b16 %v152, %v151
    %v166 = vpack.c.b16 %v154, %v153
    %v167 = vpack.c.b16 %v156, %v155
    %v168 = vpack.c.b16 %v158, %v157
    %v169 = vpack.c.b16 %v160, %v159
    %v170 = vpack.c.b16 %v162, %v161
    %v211 = vunpack.c.l.b16 %v99
    %v212 = vunpack.c.h.b16 %v99
    %v213 = vunpack.c.l.b16 %v100
    %v214 = vunpack.c.h.b16 %v100
    %v215 = vunpack.c.l.b16 %v101
    %v216 = vunpack.c.h.b16 %v101
    %v217 = vunpack.c.l.b16 %v102
    %v218 = vunpack.c.h.b16 %v102
    %v219 = vunpack.c.l.b16 %v103
    %v220 = vunpack.c.h.b16 %v103
    %v221 = vunpack.c.l.b16 %v104
    %v222 = vunpack.c.h.b16 %v104
    %v223 = vunpack.c.l.b16 %v105
    %v224 = vunpack.c.h.b16 %v105
    %v225 = vunpack.c.l.b16 %v106
    %v226 = vunpack.c.h.b16 %v106
    %v227 = vunpack.c.l.b16 %v107
    %v228 = vunpack.c.h.b16 %v107
    %v229 = vunpack.c.l.b16 %v108
    %v230 = vunpack.c.h.b16 %v108
    %v231 = vunpack.c.l.b16 %v109
    %v232 = vunpack.c.h.b16 %v109
    %v233 = vunpack.c.l.b16 %v110
    %v234 = vunpack.c.h.b16 %v110
    %v235 = vunpack.c.l.b16 %v111
    %v236 = vunpack.c.h.b16 %v111
    %v237 = vunpack.c.l.b16 %v112
    %v238 = vunpack.c.h.b16 %v112
    %v239 = vunpack.c.l.b16 %v113
    %v240 = vunpack.c.h.b16 %v113
    %v241 = vunpack.c.l.b16 %v114
    %v242 = vunpack.c.h.b16 %v114
    %v243 = vunpack.c.l.b16 %v115
    %v244 = vunpack.c.h.b16 %v115
    %v245 = vunpack.c.l.b16 %v116
    %v246 = vunpack.c.h.b16 %v116
    %v247 = vunpack.c.l.b16 %v117
    %v248 = vunpack.c.h.b16 %v117
    %v249 = vunpack.c.l.b16 %v118
    %v250 = vunpack.c.h.b16 %v118
    %v251 = vunpack.c.l.b16 %v119
    %v252 = vunpack.c.h.b16 %v119
    %v253 = vunpack.c.l.b16 %v120
    %v254 = vunpack.c.h.b16 %v120
    %v255 = vunpack.c.l.b16 %v121
    %v256 = vunpack.c.h.b16 %v121
    %v257 = vunpack.c.l.b16 %v122
    %v258 = vunpack.c.h.b16 %v122
    %v259 = vunpack.c.l.b16 %v123
    %v260 = vunpack.c.h.b16 %v123
    %v261 = vunpack.c.l.b16 %v124
    %v262 = vunpack.c.h.b16 %v124
    %v263 = vunpack.c.l.b16 %v125
    %v264 = vunpack.c.h.b16 %v125
    %v265 = vunpack.c.l.b16 %v126
    %v266 = vunpack.c.h.b16 %v126
    %v267 = vunpack.c.l.b16 %v127
    %v268 = vunpack.c.h.b16 %v127
    %v269 = vunpack.c.l.b16 %v128
    %v270 = vunpack.c.h.b16 %v128
    %v271 = vunpack.c.l.b16 %v129
    %v272 = vunpack.c.h.b16 %v129
    %v273 = vunpack.c.l.b16 %v130
    %v274 = vunpack.c.h.b16 %v130
    %v275 = vpack.c.b16 %v215, %v211
    %v276 = vpack.c.b16 %v216, %v212
    %v277 = vpack.c.b16 %v217, %v213
    %v278 = vpack.c.b16 %v218, %v214
    %v279 = vpack.c.b16 %v223, %v219
    %v280 = vpack.c.b16 %v224, %v220
    %v281 = vpack.c.b16 %v225, %v221
    %v282 = vpack.c.b16 %v226, %v222
    %v283 = vpack.c.b16 %v231, %v227
    %v284 = vpack.c.b16 %v232, %v228
    %v285 = vpack.c.b16 %v233, %v229
    %v286 = vpack.c.b16 %v234, %v230
    %v287 = vpack.c.b16 %v239, %v235
    %v288 = vpack.c.b16 %v240, %v236
    %v289 = vpack.c.b16 %v241, %v237
    %v290 = vpack.c.b16 %v242, %v238
    %v291 = vpack.c.b16 %v247, %v243
    %v292 = vpack.c.b16 %v248, %v244
    %v293 = vpack.c.b16 %v249, %v245
    %v294 = vpack.c.b16 %v250, %v246
    %v295 = vpack.c.b16 %v255, %v251
    %v296 = vpack.c.b16 %v256, %v252
    %v297 = vpack.c.b16 %v257, %v253
    %v298 = vpack.c.b16 %v258, %v254
    %v299 = vpack.c.b16 %v263, %v259
    %v300 = vpack.c.b16 %v264, %v260
    %v301 = vpack.c.b16 %v265, %v261
    %v302 = vpack.c.b16 %v266, %v262
    %v303 = vpack.c.b16 %v271, %v267
    %v304 = vpack.c.b16 %v272, %v268
    %v305 = vpack.c.b16 %v273, %v269
    %v306 = vpack.c.b16 %v274, %v270
    %339 = vmatpush.bf16.msra.mxu0 %v303
    %340 = vmatpush.bf16.msra.mxu0 %v299
    %341 = vmatpush.bf16.msra.mxu0 %v295
    %342 = vmatpush.bf16.msra.mxu0 %v291
    %343 = vmatpush.bf16.msra.mxu0 %v287
    %344 = vmatpush.bf16.msra.mxu0 %v283
    %345 = vmatpush.bf16.msra.mxu0 %v279
    %346 = vmatpush.bf16.msra.mxu0 %v275
    %347 = vmatmul.bf16.gmra.mxu0 %v163
    %v348 = vpop.f32.mrf.mxu0
    %v349 = vadd.f32 0.0, %v348
    %v350 = vpop.f32.mrf.mxu0
    %v351 = vadd.f32 0.0, %v350
    %352 = vmatmul.bf16.gmra.mxu0 %v164
    %v353 = vpop.f32.mrf.mxu0
    %v354 = vadd.f32 0.0, %v353
    %v355 = vpop.f32.mrf.mxu0
    %v356 = vadd.f32 0.0, %v355
    %357 = vmatmul.bf16.gmra.mxu0 %v165
    %v358 = vpop.f32.mrf.mxu0
    %v359 = vadd.f32 0.0, %v358
    %v360 = vpop.f32.mrf.mxu0
    %v361 = vadd.f32 0.0, %v360
    %362 = vmatmul.bf16.gmra.mxu0 %v166
    %v363 = vpop.f32.mrf.mxu0
    %v364 = vadd.f32 0.0, %v363
    %v365 = vpop.f32.mrf.mxu0
    %v366 = vadd.f32 0.0, %v365
    %367 = vmatmul.bf16.gmra.mxu0 %v167
    %v368 = vpop.f32.mrf.mxu0
    %v369 = vadd.f32 0.0, %v368
    %v370 = vpop.f32.mrf.mxu0
    %v371 = vadd.f32 0.0, %v370
    %372 = vmatmul.bf16.gmra.mxu0 %v168
    %v373 = vpop.f32.mrf.mxu0
    %v374 = vadd.f32 0.0, %v373
    %v375 = vpop.f32.mrf.mxu0
    %v376 = vadd.f32 0.0, %v375
    %377 = vmatmul.bf16.gmra.mxu0 %v169
    %v378 = vpop.f32.mrf.mxu0
    %v379 = vadd.f32 0.0, %v378
    %v380 = vpop.f32.mrf.mxu0
    %v381 = vadd.f32 0.0, %v380
    %382 = vmatmul.bf16.gmra.mxu0 %v170
    %v383 = vpop.f32.mrf.mxu0
    %v384 = vadd.f32 0.0, %v383
    %v385 = vpop.f32.mrf.mxu0
    %v386 = vadd.f32 0.0, %v385
    %387 = vdwg.mxu0
    %388 = vmatpush.bf16.msra.mxu0 %v304
    %389 = vmatpush.bf16.msra.mxu0 %v300
    %390 = vmatpush.bf16.msra.mxu0 %v296
    %391 = vmatpush.bf16.msra.mxu0 %v292
    %392 = vmatpush.bf16.msra.mxu0 %v288
    %393 = vmatpush.bf16.msra.mxu0 %v284
    %394 = vmatpush.bf16.msra.mxu0 %v280
    %395 = vmatpush.bf16.msra.mxu0 %v276
    %396 = vmatmul.bf16.gmra.mxu0 %v163
    %v397 = vpop.f32.mrf.mxu0
    %v398 = vadd.f32 0.0, %v397
    %v399 = vpop.f32.mrf.mxu0
    %v400 = vadd.f32 0.0, %v399
    %401 = vmatmul.bf16.gmra.mxu0 %v164
    %v402 = vpop.f32.mrf.mxu0
    %v403 = vadd.f32 0.0, %v402
    %v404 = vpop.f32.mrf.mxu0
    %v405 = vadd.f32 0.0, %v404
    %406 = vmatmul.bf16.gmra.mxu0 %v165
    %v407 = vpop.f32.mrf.mxu0
    %v408 = vadd.f32 0.0, %v407
    %v409 = vpop.f32.mrf.mxu0
    %v410 = vadd.f32 0.0, %v409
    %411 = vmatmul.bf16.gmra.mxu0 %v166
    %v412 = vpop.f32.mrf.mxu0
    %v413 = vadd.f32 0.0, %v412
    %v414 = vpop.f32.mrf.mxu0
    %v415 = vadd.f32 0.0, %v414
    %416 = vmatmul.bf16.gmra.mxu0 %v167
    %v417 = vpop.f32.mrf.mxu0
    %v418 = vadd.f32 0.0, %v417
    %v419 = vpop.f32.mrf.mxu0
    %v420 = vadd.f32 0.0, %v419
    %421 = vmatmul.bf16.gmra.mxu0 %v168
    %v422 = vpop.f32.mrf.mxu0
    %v423 = vadd.f32 0.0, %v422
    %v424 = vpop.f32.mrf.mxu0
    %v425 = vadd.f32 0.0, %v424
    %426 = vmatmul.bf16.gmra.mxu0 %v169
    %v427 = vpop.f32.mrf.mxu0
    %v428 = vadd.f32 0.0, %v427
    %v429 = vpop.f32.mrf.mxu0
    %v430 = vadd.f32 0.0, %v429
    %431 = vmatmul.bf16.gmra.mxu0 %v170
    %v432 = vpop.f32.mrf.mxu0
    %v433 = vadd.f32 0.0, %v432
    %v434 = vpop.f32.mrf.mxu0
    %v435 = vadd.f32 0.0, %v434
    %436 = vdwg.mxu0
    %437 = vmatpush.bf16.msra.mxu0 %v305
    %438 = vmatpush.bf16.msra.mxu0 %v301
    %439 = vmatpush.bf16.msra.mxu0 %v297
    %440 = vmatpush.bf16.msra.mxu0 %v293
    %441 = vmatpush.bf16.msra.mxu0 %v289
    %442 = vmatpush.bf16.msra.mxu0 %v285
    %443 = vmatpush.bf16.msra.mxu0 %v281
    %444 = vmatpush.bf16.msra.mxu0 %v277
    %445 = vmatmul.bf16.gmra.mxu0 %v163
    %v446 = vpop.f32.mrf.mxu0
    %v447 = vadd.f32 0.0, %v446
    %v448 = vpop.f32.mrf.mxu0
    %v449 = vadd.f32 0.0, %v448
    %450 = vmatmul.bf16.gmra.mxu0 %v164
    %v451 = vpop.f32.mrf.mxu0
    %v452 = vadd.f32 0.0, %v451
    %v453 = vpop.f32.mrf.mxu0
    %v454 = vadd.f32 0.0, %v453
    %455 = vmatmul.bf16.gmra.mxu0 %v165
    %v456 = vpop.f32.mrf.mxu0
    %v457 = vadd.f32 0.0, %v456
    %v458 = vpop.f32.mrf.mxu0
    %v459 = vadd.f32 0.0, %v458
    %460 = vmatmul.bf16.gmra.mxu0 %v166
    %v461 = vpop.f32.mrf.mxu0
    %v462 = vadd.f32 0.0, %v461
    %v463 = vpop.f32.mrf.mxu0
    %v464 = vadd.f32 0.0, %v463
    %465 = vmatmul.bf16.gmra.mxu0 %v167
    %v466 = vpop.f32.mrf.mxu0
    %v467 = vadd.f32 0.0, %v466
    %v468 = vpop.f32.mrf.mxu0
    %v469 = vadd.f32 0.0, %v468
    %470 = vmatmul.bf16.gmra.mxu0 %v168
    %v471 = vpop.f32.mrf.mxu0
    %v472 = vadd.f32 0.0, %v471
    %v473 = vpop.f32.mrf.mxu0
    %v474 = vadd.f32 0.0, %v473
    %475 = vmatmul.bf16.gmra.mxu0 %v169
    %v476 = vpop.f32.mrf.mxu0
    %v477 = vadd.f32 0.0, %v476
    %v478 = vpop.f32.mrf.mxu0
    %v479 = vadd.f32 0.0, %v478
    %480 = vmatmul.bf16.gmra.mxu0 %v170
    %v481 = vpop.f32.mrf.mxu0
    %v482 = vadd.f32 0.0, %v481
    %v483 = vpop.f32.mrf.mxu0
    %v484 = vadd.f32 0.0, %v483
    %485 = vdwg.mxu0
    %486 = vmatpush.bf16.msra.mxu0 %v306
    %487 = vmatpush.bf16.msra.mxu0 %v302
    %488 = vmatpush.bf16.msra.mxu0 %v298
    %489 = vmatpush.bf16.msra.mxu0 %v294
    %490 = vmatpush.bf16.msra.mxu0 %v290
    %491 = vmatpush.bf16.msra.mxu0 %v286
    %492 = vmatpush.bf16.msra.mxu0 %v282
    %493 = vmatpush.bf16.msra.mxu0 %v278
    %494 = vmatmul.bf16.gmra.mxu0 %v163
    %v495 = vpop.f32.mrf.mxu0
    %v496 = vadd.f32 0.0, %v495
    %v497 = vpop.f32.mrf.mxu0
    %v498 = vadd.f32 0.0, %v497
    %499 = vmatmul.bf16.gmra.mxu0 %v164
    %v500 = vpop.f32.mrf.mxu0
    %v501 = vadd.f32 0.0, %v500
    %v502 = vpop.f32.mrf.mxu0
    %v503 = vadd.f32 0.0, %v502
    %504 = vmatmul.bf16.gmra.mxu0 %v165
    %v505 = vpop.f32.mrf.mxu0
    %v506 = vadd.f32 0.0, %v505
    %v507 = vpop.f32.mrf.mxu0
    %v508 = vadd.f32 0.0, %v507
    %509 = vmatmul.bf16.gmra.mxu0 %v166
    %v510 = vpop.f32.mrf.mxu0
    %v511 = vadd.f32 0.0, %v510
    %v512 = vpop.f32.mrf.mxu0
    %v513 = vadd.f32 0.0, %v512
    %514 = vmatmul.bf16.gmra.mxu0 %v167
    %v515 = vpop.f32.mrf.mxu0
    %v516 = vadd.f32 0.0, %v515
    %v517 = vpop.f32.mrf.mxu0
    %v518 = vadd.f32 0.0, %v517
    %519 = vmatmul.bf16.gmra.mxu0 %v168
    %v520 = vpop.f32.mrf.mxu0
    %v521 = vadd.f32 0.0, %v520
    %v522 = vpop.f32.mrf.mxu0
    %v523 = vadd.f32 0.0, %v522
    %524 = vmatmul.bf16.gmra.mxu0 %v169
    %v525 = vpop.f32.mrf.mxu0
    %v526 = vadd.f32 0.0, %v525
    %v527 = vpop.f32.mrf.mxu0
    %v528 = vadd.f32 0.0, %v527
    %529 = vmatmul.bf16.gmra.mxu0 %v170
    %v530 = vpop.f32.mrf.mxu0
    %v531 = vadd.f32 0.0, %v530
    %v532 = vpop.f32.mrf.mxu0
    %v533 = vadd.f32 0.0, %v532
    %534 = vdwg.mxu0
    %v535 = vld [vmem:[#allocation2] sm:$0xff]
    %v536 = vld [vmem:[#allocation2 + $0x8] sm:$0xff]
    %v537 = vld [vmem:[#allocation2 + $0x10] sm:$0xff]
    %v538 = vld [vmem:[#allocation2 + $0x18] sm:$0xff]
    %v539 = vld [vmem:[#allocation2 + $0x20] sm:$0xff]
    %v540 = vld [vmem:[#allocation2 + $0x28] sm:$0xff]
    %v541 = vld [vmem:[#allocation2 + $0x30] sm:$0xff]
    %v542 = vld [vmem:[#allocation2 + $0x38] sm:$0xff]
    %v543 = vld [vmem:[#allocation2 + $0x40] sm:$0xff]
    %v544 = vld [vmem:[#allocation2 + $0x48] sm:$0xff]
    %v545 = vld [vmem:[#allocation2 + $0x50] sm:$0xff]
    %v546 = vld [vmem:[#allocation2 + $0x58] sm:$0xff]
    %v547 = vld [vmem:[#allocation2 + $0x60] sm:$0xff]
    %v548 = vld [vmem:[#allocation2 + $0x68] sm:$0xff]
    %v549 = vld [vmem:[#allocation2 + $0x70] sm:$0xff]
    %v550 = vld [vmem:[#allocation2 + $0x78] sm:$0xff]
    %v551 = vmax.f32 %v349, %v398
    %v552 = vmax.f32 %v551, %v447
    %v553 = vmax.f32 %v552, %v496
    %554 = vmax.xlane.f32.xlu0 %v553
    %v555 = vpop.xlane.xlu0 %554
    %v556 = vmax.f32 %v351, %v400
    %v557 = vmax.f32 %v556, %v449
    %v558 = vmax.f32 %v557, %v498
    %559 = vmax.xlane.f32.xlu0 %v558
    %v560 = vpop.xlane.xlu0 %559
    %v561 = vmax.f32 %v354, %v403
    %v562 = vmax.f32 %v561, %v452
    %v563 = vmax.f32 %v562, %v501
    %564 = vmax.xlane.f32.xlu0 %v563
    %v565 = vpop.xlane.xlu0 %564
    %v566 = vmax.f32 %v356, %v405
    %v567 = vmax.f32 %v566, %v454
    %v568 = vmax.f32 %v567, %v503
    %569 = vmax.xlane.f32.xlu0 %v568
    %v570 = vpop.xlane.xlu0 %569
    %v571 = vmax.f32 %v359, %v408
    %v572 = vmax.f32 %v571, %v457
    %v573 = vmax.f32 %v572, %v506
    %574 = vmax.xlane.f32.xlu0 %v573
    %v575 = vpop.xlane.xlu0 %574
    %v576 = vmax.f32 %v361, %v410
    %v577 = vmax.f32 %v576, %v459
    %v578 = vmax.f32 %v577, %v508
    %579 = vmax.xlane.f32.xlu0 %v578
    %v580 = vpop.xlane.xlu0 %579
    %v581 = vmax.f32 %v364, %v413
    %v582 = vmax.f32 %v581, %v462
    %v583 = vmax.f32 %v582, %v511
    %584 = vmax.xlane.f32.xlu0 %v583
    %v585 = vpop.xlane.xlu0 %584
    %v586 = vmax.f32 %v366, %v415
    %v587 = vmax.f32 %v586, %v464
    %v588 = vmax.f32 %v587, %v513
    %589 = vmax.xlane.f32.xlu0 %v588
    %v590 = vpop.xlane.xlu0 %589
    %v591 = vmax.f32 %v369, %v418
    %v592 = vmax.f32 %v591, %v467
    %v593 = vmax.f32 %v592, %v516
    %594 = vmax.xlane.f32.xlu0 %v593
    %v595 = vpop.xlane.xlu0 %594
    %v596 = vmax.f32 %v371, %v420
    %v597 = vmax.f32 %v596, %v469
    %v598 = vmax.f32 %v597, %v518
    %599 = vmax.xlane.f32.xlu0 %v598
    %v600 = vpop.xlane.xlu0 %599
    %v601 = vmax.f32 %v374, %v423
    %v602 = vmax.f32 %v601, %v472
    %v603 = vmax.f32 %v602, %v521
    %604 = vmax.xlane.f32.xlu0 %v603
    %v605 = vpop.xlane.xlu0 %604
    %v606 = vmax.f32 %v376, %v425
    %v607 = vmax.f32 %v606, %v474
    %v608 = vmax.f32 %v607, %v523
    %609 = vmax.xlane.f32.xlu0 %v608
    %v610 = vpop.xlane.xlu0 %609
    %v611 = vmax.f32 %v379, %v428
    %v612 = vmax.f32 %v611, %v477
    %v613 = vmax.f32 %v612, %v526
    %614 = vmax.xlane.f32.xlu0 %v613
    %v615 = vpop.xlane.xlu0 %614
    %v616 = vmax.f32 %v381, %v430
    %v617 = vmax.f32 %v616, %v479
    %v618 = vmax.f32 %v617, %v528
    %619 = vmax.xlane.f32.xlu0 %v618
    %v620 = vpop.xlane.xlu0 %619
    %v621 = vmax.f32 %v384, %v433
    %v622 = vmax.f32 %v621, %v482
    %v623 = vmax.f32 %v622, %v531
    %624 = vmax.xlane.f32.xlu0 %v623
    %v625 = vpop.xlane.xlu0 %624
    %v626 = vmax.f32 %v386, %v435
    %v627 = vmax.f32 %v626, %v484
    %v628 = vmax.f32 %v627, %v533
    %629 = vmax.xlane.f32.xlu0 %v628
    %v630 = vpop.xlane.xlu0 %629
    %v631 = vmax.f32 %v535, %v555
    %v632 = vmax.f32 %v536, %v560
    %v633 = vmax.f32 %v537, %v565
    %v634 = vmax.f32 %v538, %v570
    %v635 = vmax.f32 %v539, %v575
    %v636 = vmax.f32 %v540, %v580
    %v637 = vmax.f32 %v541, %v585
    %v638 = vmax.f32 %v542, %v590
    %v639 = vmax.f32 %v543, %v595
    %v640 = vmax.f32 %v544, %v600
    %v641 = vmax.f32 %v545, %v605
    %v642 = vmax.f32 %v546, %v610
    %v643 = vmax.f32 %v547, %v615
    %v644 = vmax.f32 %v548, %v620
    %v645 = vmax.f32 %v549, %v625
    %v646 = vmax.f32 %v550, %v630
    %v647 = vld [vmem:[#allocation3] sm:$0xff]
    %v648 = vld [vmem:[#allocation3 + $0x8] sm:$0xff]
    %v649 = vld [vmem:[#allocation3 + $0x10] sm:$0xff]
    %v650 = vld [vmem:[#allocation3 + $0x18] sm:$0xff]
    %v651 = vld [vmem:[#allocation3 + $0x20] sm:$0xff]
    %v652 = vld [vmem:[#allocation3 + $0x28] sm:$0xff]
    %v653 = vld [vmem:[#allocation3 + $0x30] sm:$0xff]
    %v654 = vld [vmem:[#allocation3 + $0x38] sm:$0xff]
    %v655 = vld [vmem:[#allocation3 + $0x40] sm:$0xff]
    %v656 = vld [vmem:[#allocation3 + $0x48] sm:$0xff]
    %v657 = vld [vmem:[#allocation3 + $0x50] sm:$0xff]
    %v658 = vld [vmem:[#allocation3 + $0x58] sm:$0xff]
    %v659 = vld [vmem:[#allocation3 + $0x60] sm:$0xff]
    %v660 = vld [vmem:[#allocation3 + $0x68] sm:$0xff]
    %v661 = vld [vmem:[#allocation3 + $0x70] sm:$0xff]
    %v662 = vld [vmem:[#allocation3 + $0x78] sm:$0xff]
    %v663 = vsub.f32 %v535, %v631
    %v664 = vsub.f32 %v536, %v632
    %v665 = vsub.f32 %v537, %v633
    %v666 = vsub.f32 %v538, %v634
    %v667 = vsub.f32 %v539, %v635
    %v668 = vsub.f32 %v540, %v636
    %v669 = vsub.f32 %v541, %v637
    %v670 = vsub.f32 %v542, %v638
    %v671 = vsub.f32 %v543, %v639
    %v672 = vsub.f32 %v544, %v640
    %v673 = vsub.f32 %v545, %v641
    %v674 = vsub.f32 %v546, %v642
    %v675 = vsub.f32 %v547, %v643
    %v676 = vsub.f32 %v548, %v644
    %v677 = vsub.f32 %v549, %v645
    %v678 = vsub.f32 %v550, %v646
    %v679 = vmul.f32 %v663, 1.442695
    %v680 = vpow.pop %v679
    %v681 = vmul.f32 %v664, 1.442695
    %v682 = vpow.pop %v681
    %v683 = vmul.f32 %v665, 1.442695
    %v684 = vpow.pop %v683
    %v685 = vmul.f32 %v666, 1.442695
    %v686 = vpow.pop %v685
    %v687 = vmul.f32 %v667, 1.442695
    %v688 = vpow.pop %v687
    %v689 = vmul.f32 %v668, 1.442695
    %v690 = vpow.pop %v689
    %v691 = vmul.f32 %v669, 1.442695
    %v692 = vpow.pop %v691
    %v693 = vmul.f32 %v670, 1.442695
    %v694 = vpow.pop %v693
    %v695 = vmul.f32 %v671, 1.442695
    %v696 = vpow.pop %v695
    %v697 = vmul.f32 %v672, 1.442695
    %v698 = vpow.pop %v697
    %v699 = vmul.f32 %v673, 1.442695
    %v700 = vpow.pop %v699
    %v701 = vmul.f32 %v674, 1.442695
    %v702 = vpow.pop %v701
    %v703 = vmul.f32 %v675, 1.442695
    %v704 = vpow.pop %v703
    %v705 = vmul.f32 %v676, 1.442695
    %v706 = vpow.pop %v705
    %v707 = vmul.f32 %v677, 1.442695
    %v708 = vpow.pop %v707
    %v709 = vmul.f32 %v678, 1.442695
    %v710 = vpow.pop %v709
    %v711 = vmul.f32 %v647, %v680
    %v712 = vmul.f32 %v648, %v682
    %v713 = vmul.f32 %v649, %v684
    %v714 = vmul.f32 %v650, %v686
    %v715 = vmul.f32 %v651, %v688
    %v716 = vmul.f32 %v652, %v690
    %v717 = vmul.f32 %v653, %v692
    %v718 = vmul.f32 %v654, %v694
    %v719 = vmul.f32 %v655, %v696
    %v720 = vmul.f32 %v656, %v698
    %v721 = vmul.f32 %v657, %v700
    %v722 = vmul.f32 %v658, %v702
    %v723 = vmul.f32 %v659, %v704
    %v724 = vmul.f32 %v660, %v706
    %v725 = vmul.f32 %v661, %v708
    %v726 = vmul.f32 %v662, %v710
    %728 = vset.pattern.permute.xlu0 0
    %729 = vperm.xlu0 %728, %v631
    %v730 = vpop.permute.xlu0 %729
    %733 = vset.pattern.permute.xlu0 0
    %734 = vperm.xlu0 %733, %v632
    %v735 = vpop.permute.xlu0 %734
    %738 = vset.pattern.permute.xlu0 0
    %739 = vperm.xlu0 %738, %v633
    %v740 = vpop.permute.xlu0 %739
    %743 = vset.pattern.permute.xlu0 0
    %744 = vperm.xlu0 %743, %v634
    %v745 = vpop.permute.xlu0 %744
    %748 = vset.pattern.permute.xlu0 0
    %749 = vperm.xlu0 %748, %v635
    %v750 = vpop.permute.xlu0 %749
    %753 = vset.pattern.permute.xlu0 0
    %754 = vperm.xlu0 %753, %v636
    %v755 = vpop.permute.xlu0 %754
    %758 = vset.pattern.permute.xlu0 0
    %759 = vperm.xlu0 %758, %v637
    %v760 = vpop.permute.xlu0 %759
    %763 = vset.pattern.permute.xlu0 0
    %764 = vperm.xlu0 %763, %v638
    %v765 = vpop.permute.xlu0 %764
    %768 = vset.pattern.permute.xlu0 0
    %769 = vperm.xlu0 %768, %v639
    %v770 = vpop.permute.xlu0 %769
    %773 = vset.pattern.permute.xlu0 0
    %774 = vperm.xlu0 %773, %v640
    %v775 = vpop.permute.xlu0 %774
    %778 = vset.pattern.permute.xlu0 0
    %779 = vperm.xlu0 %778, %v641
    %v780 = vpop.permute.xlu0 %779
    %783 = vset.pattern.permute.xlu0 0
    %784 = vperm.xlu0 %783, %v642
    %v785 = vpop.permute.xlu0 %784
    %788 = vset.pattern.permute.xlu0 0
    %789 = vperm.xlu0 %788, %v643
    %v790 = vpop.permute.xlu0 %789
    %793 = vset.pattern.permute.xlu0 0
    %794 = vperm.xlu0 %793, %v644
    %v795 = vpop.permute.xlu0 %794
    %798 = vset.pattern.permute.xlu0 0
    %799 = vperm.xlu0 %798, %v645
    %v800 = vpop.permute.xlu0 %799
    %803 = vset.pattern.permute.xlu0 0
    %804 = vperm.xlu0 %803, %v646
    %v805 = vpop.permute.xlu0 %804
    %v807 = vsub.f32 %v349, %v730
    %v808 = vsub.f32 %v398, %v730
    %v809 = vsub.f32 %v447, %v730
    %v810 = vsub.f32 %v496, %v730
    %v811 = vsub.f32 %v351, %v735
    %v812 = vsub.f32 %v400, %v735
    %v813 = vsub.f32 %v449, %v735
    %v814 = vsub.f32 %v498, %v735
    %v815 = vsub.f32 %v354, %v740
    %v816 = vsub.f32 %v403, %v740
    %v817 = vsub.f32 %v452, %v740
    %v818 = vsub.f32 %v501, %v740
    %v819 = vsub.f32 %v356, %v745
    %v820 = vsub.f32 %v405, %v745
    %v821 = vsub.f32 %v454, %v745
    %v822 = vsub.f32 %v503, %v745
    %v823 = vsub.f32 %v359, %v750
    %v824 = vsub.f32 %v408, %v750
    %v825 = vsub.f32 %v457, %v750
    %v826 = vsub.f32 %v506, %v750
    %v827 = vsub.f32 %v361, %v755
    %v828 = vsub.f32 %v410, %v755
    %v829 = vsub.f32 %v459, %v755
    %v830 = vsub.f32 %v508, %v755
    %v831 = vsub.f32 %v364, %v760
    %v832 = vsub.f32 %v413, %v760
    %v833 = vsub.f32 %v462, %v760
    %v834 = vsub.f32 %v511, %v760
    %v835 = vsub.f32 %v366, %v765
    %v836 = vsub.f32 %v415, %v765
    %v837 = vsub.f32 %v464, %v765
    %v838 = vsub.f32 %v513, %v765
    %v839 = vsub.f32 %v369, %v770
    %v840 = vsub.f32 %v418, %v770
    %v841 = vsub.f32 %v467, %v770
    %v842 = vsub.f32 %v516, %v770
    %v843 = vsub.f32 %v371, %v775
    %v844 = vsub.f32 %v420, %v775
    %v845 = vsub.f32 %v469, %v775
    %v846 = vsub.f32 %v518, %v775
    %v847 = vsub.f32 %v374, %v780
    %v848 = vsub.f32 %v423, %v780
    %v849 = vsub.f32 %v472, %v780
    %v850 = vsub.f32 %v521, %v780
    %v851 = vsub.f32 %v376, %v785
    %v852 = vsub.f32 %v425, %v785
    %v853 = vsub.f32 %v474, %v785
    %v854 = vsub.f32 %v523, %v785
    %v855 = vsub.f32 %v379, %v790
    %v856 = vsub.f32 %v428, %v790
    %v857 = vsub.f32 %v477, %v790
    %v858 = vsub.f32 %v526, %v790
    %v859 = vsub.f32 %v381, %v795
    %v860 = vsub.f32 %v430, %v795
    %v861 = vsub.f32 %v479, %v795
    %v862 = vsub.f32 %v528, %v795
    %v863 = vsub.f32 %v384, %v800
    %v864 = vsub.f32 %v433, %v800
    %v865 = vsub.f32 %v482, %v800
    %v866 = vsub.f32 %v531, %v800
    %v867 = vsub.f32 %v386, %v805
    %v868 = vsub.f32 %v435, %v805
    %v869 = vsub.f32 %v484, %v805
    %v870 = vsub.f32 %v533, %v805
    %v871 = vmul.f32 %v807, 1.442695
    %v872 = vpow.pop %v871
    %v873 = vmul.f32 %v808, 1.442695
    %v874 = vpow.pop %v873
    %v875 = vmul.f32 %v809, 1.442695
    %v876 = vpow.pop %v875
    %v877 = vmul.f32 %v810, 1.442695
    %v878 = vpow.pop %v877
    %v879 = vmul.f32 %v811, 1.442695
    %v880 = vpow.pop %v879
    %v881 = vmul.f32 %v812, 1.442695
    %v882 = vpow.pop %v881
    %v883 = vmul.f32 %v813, 1.442695
    %v884 = vpow.pop %v883
    %v885 = vmul.f32 %v814, 1.442695
    %v886 = vpow.pop %v885
    %v887 = vmul.f32 %v815, 1.442695
    %v888 = vpow.pop %v887
    %v889 = vmul.f32 %v816, 1.442695
    %v890 = vpow.pop %v889
    %v891 = vmul.f32 %v817, 1.442695
    %v892 = vpow.pop %v891
    %v893 = vmul.f32 %v818, 1.442695
    %v894 = vpow.pop %v893
    %v895 = vmul.f32 %v819, 1.442695
    %v896 = vpow.pop %v895
    %v897 = vmul.f32 %v820, 1.442695
    %v898 = vpow.pop %v897
    %v899 = vmul.f32 %v821, 1.442695
    %v900 = vpow.pop %v899
    %v901 = vmul.f32 %v822, 1.442695
    %v902 = vpow.pop %v901
    %v903 = vmul.f32 %v823, 1.442695
    %v904 = vpow.pop %v903
    %v905 = vmul.f32 %v824, 1.442695
    %v906 = vpow.pop %v905
    %v907 = vmul.f32 %v825, 1.442695
    %v908 = vpow.pop %v907
    %v909 = vmul.f32 %v826, 1.442695
    %v910 = vpow.pop %v909
    %v911 = vmul.f32 %v827, 1.442695
    %v912 = vpow.pop %v911
    %v913 = vmul.f32 %v828, 1.442695
    %v914 = vpow.pop %v913
    %v915 = vmul.f32 %v829, 1.442695
    %v916 = vpow.pop %v915
    %v917 = vmul.f32 %v830, 1.442695
    %v918 = vpow.pop %v917
    %v919 = vmul.f32 %v831, 1.442695
    %v920 = vpow.pop %v919
    %v921 = vmul.f32 %v832, 1.442695
    %v922 = vpow.pop %v921
    %v923 = vmul.f32 %v833, 1.442695
    %v924 = vpow.pop %v923
    %v925 = vmul.f32 %v834, 1.442695
    %v926 = vpow.pop %v925
    %v927 = vmul.f32 %v835, 1.442695
    %v928 = vpow.pop %v927
    %v929 = vmul.f32 %v836, 1.442695
    %v930 = vpow.pop %v929
    %v931 = vmul.f32 %v837, 1.442695
    %v932 = vpow.pop %v931
    %v933 = vmul.f32 %v838, 1.442695
    %v934 = vpow.pop %v933
    %v935 = vmul.f32 %v839, 1.442695
    %v936 = vpow.pop %v935
    %v937 = vmul.f32 %v840, 1.442695
    %v938 = vpow.pop %v937
    %v939 = vmul.f32 %v841, 1.442695
    %v940 = vpow.pop %v939
    %v941 = vmul.f32 %v842, 1.442695
    %v942 = vpow.pop %v941
    %v943 = vmul.f32 %v843, 1.442695
    %v944 = vpow.pop %v943
    %v945 = vmul.f32 %v844, 1.442695
    %v946 = vpow.pop %v945
    %v947 = vmul.f32 %v845, 1.442695
    %v948 = vpow.pop %v947
    %v949 = vmul.f32 %v846, 1.442695
    %v950 = vpow.pop %v949
    %v951 = vmul.f32 %v847, 1.442695
    %v952 = vpow.pop %v951
    %v953 = vmul.f32 %v848, 1.442695
    %v954 = vpow.pop %v953
    %v955 = vmul.f32 %v849, 1.442695
    %v956 = vpow.pop %v955
    %v957 = vmul.f32 %v850, 1.442695
    %v958 = vpow.pop %v957
    %v959 = vmul.f32 %v851, 1.442695
    %v960 = vpow.pop %v959
    %v961 = vmul.f32 %v852, 1.442695
    %v962 = vpow.pop %v961
    %v963 = vmul.f32 %v853, 1.442695
    %v964 = vpow.pop %v963
    %v965 = vmul.f32 %v854, 1.442695
    %v966 = vpow.pop %v965
    %v967 = vmul.f32 %v855, 1.442695
    %v968 = vpow.pop %v967
    %v969 = vmul.f32 %v856, 1.442695
    %v970 = vpow.pop %v969
    %v971 = vmul.f32 %v857, 1.442695
    %v972 = vpow.pop %v971
    %v973 = vmul.f32 %v858, 1.442695
    %v974 = vpow.pop %v973
    %v975 = vmul.f32 %v859, 1.442695
    %v976 = vpow.pop %v975
    %v977 = vmul.f32 %v860, 1.442695
    %v978 = vpow.pop %v977
    %v979 = vmul.f32 %v861, 1.442695
    %v980 = vpow.pop %v979
    %v981 = vmul.f32 %v862, 1.442695
    %v982 = vpow.pop %v981
    %v983 = vmul.f32 %v863, 1.442695
    %v984 = vpow.pop %v983
    %v985 = vmul.f32 %v864, 1.442695
    %v986 = vpow.pop %v985
    %v987 = vmul.f32 %v865, 1.442695
    %v988 = vpow.pop %v987
    %v989 = vmul.f32 %v866, 1.442695
    %v990 = vpow.pop %v989
    %v991 = vmul.f32 %v867, 1.442695
    %v992 = vpow.pop %v991
    %v993 = vmul.f32 %v868, 1.442695
    %v994 = vpow.pop %v993
    %v995 = vmul.f32 %v869, 1.442695
    %v996 = vpow.pop %v995
    %v997 = vmul.f32 %v870, 1.442695
    %v998 = vpow.pop %v997
    %v999 = vadd.f32 %v872, %v874
    %v1000 = vadd.f32 %v999, %v876
    %v1001 = vadd.f32 %v1000, %v878
    %1002 = vadd.xlane.f32.xlu0 %v1001
    %v1003 = vpop.xlane.xlu0 %1002
    %v1004 = vadd.f32 %v880, %v882
    %v1005 = vadd.f32 %v1004, %v884
    %v1006 = vadd.f32 %v1005, %v886
    %1007 = vadd.xlane.f32.xlu0 %v1006
    %v1008 = vpop.xlane.xlu0 %1007
    %v1009 = vadd.f32 %v888, %v890
    %v1010 = vadd.f32 %v1009, %v892
    %v1011 = vadd.f32 %v1010, %v894
    %1012 = vadd.xlane.f32.xlu0 %v1011
    %v1013 = vpop.xlane.xlu0 %1012
    %v1014 = vadd.f32 %v896, %v898
    %v1015 = vadd.f32 %v1014, %v900
    %v1016 = vadd.f32 %v1015, %v902
    %1017 = vadd.xlane.f32.xlu0 %v1016
    %v1018 = vpop.xlane.xlu0 %1017
    %v1019 = vadd.f32 %v904, %v906
    %v1020 = vadd.f32 %v1019, %v908
    %v1021 = vadd.f32 %v1020, %v910
    %1022 = vadd.xlane.f32.xlu0 %v1021
    %v1023 = vpop.xlane.xlu0 %1022
    %v1024 = vadd.f32 %v912, %v914
    %v1025 = vadd.f32 %v1024, %v916
    %v1026 = vadd.f32 %v1025, %v918
    %1027 = vadd.xlane.f32.xlu0 %v1026
    %v1028 = vpop.xlane.xlu0 %1027
    %v1029 = vadd.f32 %v920, %v922
    %v1030 = vadd.f32 %v1029, %v924
    %v1031 = vadd.f32 %v1030, %v926
    %1032 = vadd.xlane.f32.xlu0 %v1031
    %v1033 = vpop.xlane.xlu0 %1032
    %v1034 = vadd.f32 %v928, %v930
    %v1035 = vadd.f32 %v1034, %v932
    %v1036 = vadd.f32 %v1035, %v934
    %1037 = vadd.xlane.f32.xlu0 %v1036
    %v1038 = vpop.xlane.xlu0 %1037
    %v1039 = vadd.f32 %v936, %v938
    %v1040 = vadd.f32 %v1039, %v940
    %v1041 = vadd.f32 %v1040, %v942
    %1042 = vadd.xlane.f32.xlu0 %v1041
    %v1043 = vpop.xlane.xlu0 %1042
    %v1044 = vadd.f32 %v944, %v946
    %v1045 = vadd.f32 %v1044, %v948
    %v1046 = vadd.f32 %v1045, %v950
    %1047 = vadd.xlane.f32.xlu0 %v1046
    %v1048 = vpop.xlane.xlu0 %1047
    %v1049 = vadd.f32 %v952, %v954
    %v1050 = vadd.f32 %v1049, %v956
    %v1051 = vadd.f32 %v1050, %v958
    %1052 = vadd.xlane.f32.xlu0 %v1051
    %v1053 = vpop.xlane.xlu0 %1052
    %v1054 = vadd.f32 %v960, %v962
    %v1055 = vadd.f32 %v1054, %v964
    %v1056 = vadd.f32 %v1055, %v966
    %1057 = vadd.xlane.f32.xlu0 %v1056
    %v1058 = vpop.xlane.xlu0 %1057
    %v1059 = vadd.f32 %v968, %v970
    %v1060 = vadd.f32 %v1059, %v972
    %v1061 = vadd.f32 %v1060, %v974
    %1062 = vadd.xlane.f32.xlu0 %v1061
    %v1063 = vpop.xlane.xlu0 %1062
    %v1064 = vadd.f32 %v976, %v978
    %v1065 = vadd.f32 %v1064, %v980
    %v1066 = vadd.f32 %v1065, %v982
    %1067 = vadd.xlane.f32.xlu0 %v1066
    %v1068 = vpop.xlane.xlu0 %1067
    %v1069 = vadd.f32 %v984, %v986
    %v1070 = vadd.f32 %v1069, %v988
    %v1071 = vadd.f32 %v1070, %v990
    %1072 = vadd.xlane.f32.xlu0 %v1071
    %v1073 = vpop.xlane.xlu0 %1072
    %v1074 = vadd.f32 %v992, %v994
    %v1075 = vadd.f32 %v1074, %v996
    %v1076 = vadd.f32 %v1075, %v998
    %1077 = vadd.xlane.f32.xlu0 %v1076
    %v1078 = vpop.xlane.xlu0 %1077
    %v1079 = vadd.f32 %v711, %v1003
    %v1080 = vadd.f32 %v712, %v1008
    %v1081 = vadd.f32 %v713, %v1013
    %v1082 = vadd.f32 %v714, %v1018
    %v1083 = vadd.f32 %v715, %v1023
    %v1084 = vadd.f32 %v716, %v1028
    %v1085 = vadd.f32 %v717, %v1033
    %v1086 = vadd.f32 %v718, %v1038
    %v1087 = vadd.f32 %v719, %v1043
    %v1088 = vadd.f32 %v720, %v1048
    %v1089 = vadd.f32 %v721, %v1053
    %v1090 = vadd.f32 %v722, %v1058
    %v1091 = vadd.f32 %v723, %v1063
    %v1092 = vadd.f32 %v724, %v1068
    %v1093 = vadd.f32 %v725, %v1073
    %v1094 = vadd.f32 %v726, %v1078
    %vm1095 = vcmask 7168
    %1096 = vst.msk [vmem:[#allocation3] sm:$0xff] %vm1095, %v1079
    %1097 = vst.msk [vmem:[#allocation3 + $0x8] sm:$0xff] %vm1095, %v1080
    %1098 = vst.msk [vmem:[#allocation3 + $0x10] sm:$0xff] %vm1095, %v1081
    %1099 = vst.msk [vmem:[#allocation3 + $0x18] sm:$0xff] %vm1095, %v1082
    %1100 = vst.msk [vmem:[#allocation3 + $0x20] sm:$0xff] %vm1095, %v1083
    %1101 = vst.msk [vmem:[#allocation3 + $0x28] sm:$0xff] %vm1095, %v1084
    %1102 = vst.msk [vmem:[#allocation3 + $0x30] sm:$0xff] %vm1095, %v1085
    %1103 = vst.msk [vmem:[#allocation3 + $0x38] sm:$0xff] %vm1095, %v1086
    %1104 = vst.msk [vmem:[#allocation3 + $0x40] sm:$0xff] %vm1095, %v1087
    %1105 = vst.msk [vmem:[#allocation3 + $0x48] sm:$0xff] %vm1095, %v1088
    %1106 = vst.msk [vmem:[#allocation3 + $0x50] sm:$0xff] %vm1095, %v1089
    %1107 = vst.msk [vmem:[#allocation3 + $0x58] sm:$0xff] %vm1095, %v1090
    %1108 = vst.msk [vmem:[#allocation3 + $0x60] sm:$0xff] %vm1095, %v1091
    %1109 = vst.msk [vmem:[#allocation3 + $0x68] sm:$0xff] %vm1095, %v1092
    %1110 = vst.msk [vmem:[#allocation3 + $0x70] sm:$0xff] %vm1095, %v1093
    %1111 = vst.msk [vmem:[#allocation3 + $0x78] sm:$0xff] %vm1095, %v1094
    %1112 = vst.msk [vmem:[#allocation2] sm:$0xff] %vm1095, %v631
    %1113 = vst.msk [vmem:[#allocation2 + $0x8] sm:$0xff] %vm1095, %v632
    %1114 = vst.msk [vmem:[#allocation2 + $0x10] sm:$0xff] %vm1095, %v633
    %1115 = vst.msk [vmem:[#allocation2 + $0x18] sm:$0xff] %vm1095, %v634
    %1116 = vst.msk [vmem:[#allocation2 + $0x20] sm:$0xff] %vm1095, %v635
    %1117 = vst.msk [vmem:[#allocation2 + $0x28] sm:$0xff] %vm1095, %v636
    %1118 = vst.msk [vmem:[#allocation2 + $0x30] sm:$0xff] %vm1095, %v637
    %1119 = vst.msk [vmem:[#allocation2 + $0x38] sm:$0xff] %vm1095, %v638
    %1120 = vst.msk [vmem:[#allocation2 + $0x40] sm:$0xff] %vm1095, %v639
    %1121 = vst.msk [vmem:[#allocation2 + $0x48] sm:$0xff] %vm1095, %v640
    %1122 = vst.msk [vmem:[#allocation2 + $0x50] sm:$0xff] %vm1095, %v641
    %1123 = vst.msk [vmem:[#allocation2 + $0x58] sm:$0xff] %vm1095, %v642
    %1124 = vst.msk [vmem:[#allocation2 + $0x60] sm:$0xff] %vm1095, %v643
    %1125 = vst.msk [vmem:[#allocation2 + $0x68] sm:$0xff] %vm1095, %v644
    %1126 = vst.msk [vmem:[#allocation2 + $0x70] sm:$0xff] %vm1095, %v645
    %1127 = vst.msk [vmem:[#allocation2 + $0x78] sm:$0xff] %vm1095, %v646
    %1128 = vst [vmem:[#allocation9] sm:$0xff] %v349
    %1129 = vst [vmem:[#allocation9 + $0x8] sm:$0xff] %v398
    %1130 = vst [vmem:[#allocation9 + $0x10] sm:$0xff] %v447
    %1131 = vst [vmem:[#allocation9 + $0x18] sm:$0xff] %v496
    %1132 = vst [vmem:[#allocation9 + $0x20] sm:$0xff] %v351
    %1133 = vst [vmem:[#allocation9 + $0x28] sm:$0xff] %v400
    %1134 = vst [vmem:[#allocation9 + $0x30] sm:$0xff] %v449
    %1135 = vst [vmem:[#allocation9 + $0x38] sm:$0xff] %v498
    %1136 = vst [vmem:[#allocation9 + $0x40] sm:$0xff] %v354
    %1137 = vst [vmem:[#allocation9 + $0x48] sm:$0xff] %v403
    %1138 = vst [vmem:[#allocation9 + $0x50] sm:$0xff] %v452
    %1139 = vst [vmem:[#allocation9 + $0x58] sm:$0xff] %v501
    %1140 = vst [vmem:[#allocation9 + $0x60] sm:$0xff] %v356
    %1141 = vst [vmem:[#allocation9 + $0x68] sm:$0xff] %v405
    %1142 = vst [vmem:[#allocation9 + $0x70] sm:$0xff] %v454
    %1143 = vst [vmem:[#allocation9 + $0x78] sm:$0xff] %v503
    %1144 = vst [vmem:[#allocation9 + $0x80] sm:$0xff] %v359
    %1145 = vst [vmem:[#allocation9 + $0x88] sm:$0xff] %v408
    %1146 = vst [vmem:[#allocation9 + $0x90] sm:$0xff] %v457
    %1147 = vst [vmem:[#allocation9 + $0x98] sm:$0xff] %v506
    %1148 = vst [vmem:[#allocation9 + $0xa0] sm:$0xff] %v361
    %1149 = vst [vmem:[#allocation9 + $0xa8] sm:$0xff] %v410
    %1150 = vst [vmem:[#allocation9 + $0xb0] sm:$0xff] %v459
    %1151 = vst [vmem:[#allocation9 + $0xb8] sm:$0xff] %v508
    %1152 = vst [vmem:[#allocation9 + $0xc0] sm:$0xff] %v364
    %1153 = vst [vmem:[#allocation9 + $0xc8] sm:$0xff] %v413
    %1154 = vst [vmem:[#allocation9 + $0xd0] sm:$0xff] %v462
    %1155 = vst [vmem:[#allocation9 + $0xd8] sm:$0xff] %v511
    %1156 = vst [vmem:[#allocation9 + $0xe0] sm:$0xff] %v366
    %1157 = vst [vmem:[#allocation9 + $0xe8] sm:$0xff] %v415
    %1158 = vst [vmem:[#allocation9 + $0xf0] sm:$0xff] %v464
    %1159 = vst [vmem:[#allocation9 + $0xf8] sm:$0xff] %v513
    %1160 = vst [vmem:[#allocation9 + $0x100] sm:$0xff] %v369
    %1161 = vst [vmem:[#allocation9 + $0x108] sm:$0xff] %v418
    %1162 = vst [vmem:[#allocation9 + $0x110] sm:$0xff] %v467
    %1163 = vst [vmem:[#allocation9 + $0x118] sm:$0xff] %v516
    %1164 = vst [vmem:[#allocation9 + $0x120] sm:$0xff] %v371
    %1165 = vst [vmem:[#allocation9 + $0x128] sm:$0xff] %v420
    %1166 = vst [vmem:[#allocation9 + $0x130] sm:$0xff] %v469
    %1167 = vst [vmem:[#allocation9 + $0x138] sm:$0xff] %v518
    %1168 = vst [vmem:[#allocation9 + $0x140] sm:$0xff] %v374
    %1169 = vst [vmem:[#allocation9 + $0x148] sm:$0xff] %v423
    %1170 = vst [vmem:[#allocation9 + $0x150] sm:$0xff] %v472
    %1171 = vst [vmem:[#allocation9 + $0x158] sm:$0xff] %v521
    %1172 = vst [vmem:[#allocation9 + $0x160] sm:$0xff] %v376
    %1173 = vst [vmem:[#allocation9 + $0x168] sm:$0xff] %v425
    %1174 = vst [vmem:[#allocation9 + $0x170] sm:$0xff] %v474
    %1175 = vst [vmem:[#allocation9 + $0x178] sm:$0xff] %v523
    %1176 = vst [vmem:[#allocation9 + $0x180] sm:$0xff] %v379
    %1177 = vst [vmem:[#allocation9 + $0x188] sm:$0xff] %v428
    %1178 = vst [vmem:[#allocation9 + $0x190] sm:$0xff] %v477
    %1179 = vst [vmem:[#allocation9 + $0x198] sm:$0xff] %v526
    %1180 = vst [vmem:[#allocation9 + $0x1a0] sm:$0xff] %v381
    %1181 = vst [vmem:[#allocation9 + $0x1a8] sm:$0xff] %v430
    %1182 = vst [vmem:[#allocation9 + $0x1b0] sm:$0xff] %v479
    %1183 = vst [vmem:[#allocation9 + $0x1b8] sm:$0xff] %v528
    %1184 = vst [vmem:[#allocation9 + $0x1c0] sm:$0xff] %v384
    %1185 = vst [vmem:[#allocation9 + $0x1c8] sm:$0xff] %v433
    %1186 = vst [vmem:[#allocation9 + $0x1d0] sm:$0xff] %v482
    %1187 = vst [vmem:[#allocation9 + $0x1d8] sm:$0xff] %v531
    %1188 = vst [vmem:[#allocation9 + $0x1e0] sm:$0xff] %v386
    %1189 = vst [vmem:[#allocation9 + $0x1e8] sm:$0xff] %v435
    %1190 = vst [vmem:[#allocation9 + $0x1f0] sm:$0xff] %v484
    %1191 = vst [vmem:[#allocation9 + $0x1f8] sm:$0xff] %v533
    // Predicated region
    $region22: #{tpu_custom_call.1} parent=1 // pred_check
      %p1192 = pneg %p46
    $region23: #{tpu_custom_call.1} parent=1 // pred_check_branch
      %1194 = sbr.rel (%p1192) target = $region25
    $region24: #{tpu_custom_call.1} parent=1 // pred_region
      %v1195 = vld [vmem:[#allocation2] sm:$0xff]
      %v1196 = vld [vmem:[#allocation2 + $0x8] sm:$0xff]
      %v1197 = vld [vmem:[#allocation2 + $0x10] sm:$0xff]
      %v1198 = vld [vmem:[#allocation2 + $0x18] sm:$0xff]
      %v1199 = vld [vmem:[#allocation2 + $0x20] sm:$0xff]
      %v1200 = vld [vmem:[#allocation2 + $0x28] sm:$0xff]
      %v1201 = vld [vmem:[#allocation2 + $0x30] sm:$0xff]
      %v1202 = vld [vmem:[#allocation2 + $0x38] sm:$0xff]
      %v1203 = vld [vmem:[#allocation2 + $0x40] sm:$0xff]
      %v1204 = vld [vmem:[#allocation2 + $0x48] sm:$0xff]
      %v1205 = vld [vmem:[#allocation2 + $0x50] sm:$0xff]
      %v1206 = vld [vmem:[#allocation2 + $0x58] sm:$0xff]
      %v1207 = vld [vmem:[#allocation2 + $0x60] sm:$0xff]
      %v1208 = vld [vmem:[#allocation2 + $0x68] sm:$0xff]
      %v1209 = vld [vmem:[#allocation2 + $0x70] sm:$0xff]
      %v1210 = vld [vmem:[#allocation2 + $0x78] sm:$0xff]
      %v1211 = vld [vmem:[#allocation3] sm:$0xff]
      %v1212 = vld [vmem:[#allocation3 + $0x8] sm:$0xff]
      %v1213 = vld [vmem:[#allocation3 + $0x10] sm:$0xff]
      %v1214 = vld [vmem:[#allocation3 + $0x18] sm:$0xff]
      %v1215 = vld [vmem:[#allocation3 + $0x20] sm:$0xff]
      %v1216 = vld [vmem:[#allocation3 + $0x28] sm:$0xff]
      %v1217 = vld [vmem:[#allocation3 + $0x30] sm:$0xff]
      %v1218 = vld [vmem:[#allocation3 + $0x38] sm:$0xff]
      %v1219 = vld [vmem:[#allocation3 + $0x40] sm:$0xff]
      %v1220 = vld [vmem:[#allocation3 + $0x48] sm:$0xff]
      %v1221 = vld [vmem:[#allocation3 + $0x50] sm:$0xff]
      %v1222 = vld [vmem:[#allocation3 + $0x58] sm:$0xff]
      %v1223 = vld [vmem:[#allocation3 + $0x60] sm:$0xff]
      %v1224 = vld [vmem:[#allocation3 + $0x68] sm:$0xff]
      %v1225 = vld [vmem:[#allocation3 + $0x70] sm:$0xff]
      %v1226 = vld [vmem:[#allocation3 + $0x78] sm:$0xff]
      %v1227 = vlog2.pop %v1211
      %v1228 = vmul.f32 %v1227, 0.6931472
      %v1229 = vlog2.pop %v1212
      %v1230 = vmul.f32 %v1229, 0.6931472
      %v1231 = vlog2.pop %v1213
      %v1232 = vmul.f32 %v1231, 0.6931472
      %v1233 = vlog2.pop %v1214
      %v1234 = vmul.f32 %v1233, 0.6931472
      %v1235 = vlog2.pop %v1215
      %v1236 = vmul.f32 %v1235, 0.6931472
      %v1237 = vlog2.pop %v1216
      %v1238 = vmul.f32 %v1237, 0.6931472
      %v1239 = vlog2.pop %v1217
      %v1240 = vmul.f32 %v1239, 0.6931472
      %v1241 = vlog2.pop %v1218
      %v1242 = vmul.f32 %v1241, 0.6931472
      %v1243 = vlog2.pop %v1219
      %v1244 = vmul.f32 %v1243, 0.6931472
      %v1245 = vlog2.pop %v1220
      %v1246 = vmul.f32 %v1245, 0.6931472
      %v1247 = vlog2.pop %v1221
      %v1248 = vmul.f32 %v1247, 0.6931472
      %v1249 = vlog2.pop %v1222
      %v1250 = vmul.f32 %v1249, 0.6931472
      %v1251 = vlog2.pop %v1223
      %v1252 = vmul.f32 %v1251, 0.6931472
      %v1253 = vlog2.pop %v1224
      %v1254 = vmul.f32 %v1253, 0.6931472
      %v1255 = vlog2.pop %v1225
      %v1256 = vmul.f32 %v1255, 0.6931472
      %v1257 = vlog2.pop %v1226
      %v1258 = vmul.f32 %v1257, 0.6931472
      %v1259 = vadd.f32 %v1195, %v1228
      %v1260 = vadd.f32 %v1196, %v1230
      %v1261 = vadd.f32 %v1197, %v1232
      %v1262 = vadd.f32 %v1198, %v1234
      %v1263 = vadd.f32 %v1199, %v1236
      %v1264 = vadd.f32 %v1200, %v1238
      %v1265 = vadd.f32 %v1201, %v1240
      %v1266 = vadd.f32 %v1202, %v1242
      %v1267 = vadd.f32 %v1203, %v1244
      %v1268 = vadd.f32 %v1204, %v1246
      %v1269 = vadd.f32 %v1205, %v1248
      %v1270 = vadd.f32 %v1206, %v1250
      %v1271 = vadd.f32 %v1207, %v1252
      %v1272 = vadd.f32 %v1208, %v1254
      %v1273 = vadd.f32 %v1209, %v1256
      %v1274 = vadd.f32 %v1210, %v1258
      %1275 = vst.msk [vmem:[%s3] sm:$0xff] %vm1095, %v1259
      %1276 = vst.msk [vmem:[%s3 + $0x8] sm:$0xff] %vm1095, %v1260
      %1277 = vst.msk [vmem:[%s3 + $0x10] sm:$0xff] %vm1095, %v1261
      %1278 = vst.msk [vmem:[%s3 + $0x18] sm:$0xff] %vm1095, %v1262
      %1279 = vst.msk [vmem:[%s3 + $0x20] sm:$0xff] %vm1095, %v1263
      %1280 = vst.msk [vmem:[%s3 + $0x28] sm:$0xff] %vm1095, %v1264
      %1281 = vst.msk [vmem:[%s3 + $0x30] sm:$0xff] %vm1095, %v1265
      %1282 = vst.msk [vmem:[%s3 + $0x38] sm:$0xff] %vm1095, %v1266
      %1283 = vst.msk [vmem:[%s3 + $0x40] sm:$0xff] %vm1095, %v1267
      %1284 = vst.msk [vmem:[%s3 + $0x48] sm:$0xff] %vm1095, %v1268
      %1285 = vst.msk [vmem:[%s3 + $0x50] sm:$0xff] %vm1095, %v1269
      %1286 = vst.msk [vmem:[%s3 + $0x58] sm:$0xff] %vm1095, %v1270
      %1287 = vst.msk [vmem:[%s3 + $0x60] sm:$0xff] %vm1095, %v1271
      %1288 = vst.msk [vmem:[%s3 + $0x68] sm:$0xff] %vm1095, %v1272
      %1289 = vst.msk [vmem:[%s3 + $0x70] sm:$0xff] %vm1095, %v1273
      %1290 = vst.msk [vmem:[%s3 + $0x78] sm:$0xff] %vm1095, %v1274
    $region25: #{tpu_custom_call.1} parent=1 // pred_fallthru
      _
    // Predicated region
    $region26: #{tpu_custom_call.1} parent=1 // pred_check
      _
    $region27: #{tpu_custom_call.1} parent=1 // pred_check_branch
      %1292 = sbr.rel (0) target = $region29
    $region28: #{tpu_custom_call.1} parent=1 // pred_region
      %1294 = vsyncadd [#allocation6], 0
      %s1295 = sshll.u32 [#allocation9], 4
      %s1296 = int_to_ptr.vmem [resolvable:$true] %s1295
      %s1297 = sshll.u32 %s2, 4
      %s1298 = int_to_ptr.hbm [resolvable:$true] %s1297
      %1303 = dma.vmem_to_hbm [thread:$0]  %s1296, 8192, %s1298, [#allocation6], 512, 512, 32
    $region29: #{tpu_custom_call.1} parent=1 // pred_fallthru
      _
    // Predicated region
    $region30: #{tpu_custom_call.1} parent=1 // pred_check
      _
    $region31: #{tpu_custom_call.1} parent=1 // pred_check_branch
      %1305 = sbr.rel (0) target = $region33
    $region32: #{tpu_custom_call.1} parent=1 // pred_region
      _
    $region33: #{tpu_custom_call.1} parent=1 // pred_fallthru
      _
    // Predicated region
    $region34: #{tpu_custom_call.1} parent=1 // pred_check
      _
    $region35: #{tpu_custom_call.1} parent=1 // pred_check_branch
      %1307 = sbr.rel (0) target = $region37
    $region36: #{tpu_custom_call.1} parent=1 // pred_region
      %1309 = dma.done [#allocation6], 8192
    $region37: #{tpu_custom_call.1} parent=1 // pred_fallthru
      _
    // Predicated region
    $region38: #{tpu_custom_call.1} parent=1 // pred_check
      _
    $region39: #{tpu_custom_call.1} parent=1 // pred_check_branch
      %1311 = sbr.rel (0) target = $region41
    $region40: #{tpu_custom_call.1} parent=1 // pred_region
      _
    $region41: #{tpu_custom_call.1} parent=1 // pred_fallthru
      _
    %1312 = vsyncpa [#allocation5], 1
    %1313 = vsyncpa [#allocation8], 1
    %1314 = vsyncpa [#allocation6], 1

</llo_original>
